<compile_context>
chip_gen: v5e
topology: v5e:2x2
jax: 0.10.0
libtpu: 0.0.40
codegen_flags: <defaults>
</compile_context>

<pallas_src>
import functools

import jax
import jax.numpy as jnp
from jax.experimental import pallas as pl
from jax.experimental.pallas import tpu as pltpu


# --------------------------------------------------------------------------
# helpers
# --------------------------------------------------------------------------
def _ceil_to(x, m):
    return (x + m - 1) // m * m


def _cdiv(a, b):
    return -(-a // b)


def _pad2d(x, rows, cols):
    return jnp.pad(x, ((0, rows - x.shape[0]), (0, cols - x.shape[1])))


def _vmem_limit_bytes():
    """3/4 of physical VMEM: ~96 MiB on v5e/v6e (128 MiB), ~48 MiB on v7x (64 MiB)."""
    cap = 64 * 1024 * 1024
    try:
        cap = int(getattr(pltpu.get_tpu_info(), "vmem_capacity_bytes", cap))
    except Exception:
        pass
    return (cap * 3) // 4


# --------------------------------------------------------------------------
# Pallas kernel: one GCMCConv forward over a (dst_tile, k_tile) grid.
# --------------------------------------------------------------------------
def gcmc_kernel(a_ref, xw_ref, inv_deg_ref, self_ref, w2t_ref, out_ref,
                *, tk, slice_xw):
    """grid = (num_dst_tiles, num_k_tiles); k (= rating x src) is the reduction axis.

    a_ref      [TILE_DST, TK]        int8  packed per-rating adjacency (edge counts)
    xw_ref     [TK | K_pad, H_pad]   bf16  packed X_src @ W_r^T (K-tiled or resident)
    inv_deg_ref[TILE_DST, 1]         f32   1 / max(in-degree, 1)
    self_ref   [TILE_DST, H_pad]     f32   X_dst @ W1^T + b   (loop-invariant)
    w2t_ref    [H_pad, H_pad]        bf16  W2^T (neighbour half of W_lin)
    out_ref    [TILE_DST, H_pad]     f32   output; doubles as the accumulator
    """
    k = pl.program_id(1)

    @pl.when(k == 0)
    def _init():
        out_ref[...] = jnp.zeros_like(out_ref)

    if slice_xw:
        # XW fully VMEM-resident (fetched once for the whole grid): slice this k-tile.
        start = pl.multiple_of(k * tk, 128)
        xw = xw_ref[pl.ds(start, tk), :]
    else:
        # Block already IS this k-tile (K-tiled), or there is a single k-tile.
        xw = xw_ref[...]

    # int8 edge counts -> bf16 feed for the MXU; f32 accumulation.  The upcast is
    # VPU work that hides under the A DMA (kernel is HBM-bandwidth bound).
    a = a_ref[...].astype(jnp.float32).astype(jnp.bfloat16)
    out_ref[...] += jnp.dot(a, xw, preferred_element_type=jnp.float32)

    @pl.when(k == pl.num_programs(1) - 1)
    def _epilogue():
        h_neigh = out_ref[...] * inv_deg_ref[...]            # fn.mean over in-edges
        z = self_ref[...] + jnp.dot(h_neigh.astype(w2t_ref.dtype), w2t_ref[...],
                                    preferred_element_type=jnp.float32)
        out_ref[...] = jnp.maximum(z, 0.0)                   # relu(Linear)


# --------------------------------------------------------------------------
# Tile planning + one-time adjacency packing (setup cost, NOT the hot path).
# --------------------------------------------------------------------------
def _plan(N_dst, K128, H_pad, tile_dst_req, tk_max, vmem_limit):
    tile_dst = max(32, min(_ceil_to(tile_dst_req, 32), _ceil_to(N_dst, 32)))

    # v7x has 2 TensorCores sharing the "parallel" dst axis: prefer an even
    # dst-tile count when that doesn't shrink tiles below 32 rows.
    n_tiles = _cdiv(N_dst, tile_dst)
    if n_tiles % 2 == 1 and tile_dst > 32:
        cand = _ceil_to(_cdiv(N_dst, n_tiles + 1), 32)
        if 32 <= cand < tile_dst and _cdiv(N_dst, cand) % 2 == 0:
            tile_dst = cand

    tk = max(128, min(_ceil_to(tk_max, 128), K128))

    while True:
        k_pad = _ceil_to(K128, tk)
        # XW resident (fetched once) if the double-buffered full-K block is small
        # relative to the budget; otherwise K-tile it like A.
        xw_resident = 2 * k_pad * H_pad * 2 <= vmem_limit // 3
        a_b = 2 * tile_dst * tk                               # int8, double-buffered
        xw_b = 2 * (k_pad if xw_resident else tk) * H_pad * 2
        fix_b = (2 * tile_dst * H_pad * 4 * 2                 # self + out (f32)
                 + 2 * H_pad * H_pad * 2                      # W2^T
                 + 2 * tile_dst * 4                           # inv_deg
                 + (2 << 20))                                 # slack
        if a_b + xw_b + fix_b <= vmem_limit:
            break
        if tk > 512:
            tk = max(128, _ceil_to(tk // 2, 128))
        elif tile_dst > 32:
            tile_dst = max(32, _ceil_to(tile_dst // 2, 32))
        else:
            break                                             # smallest config

    k_pad = _ceil_to(K128, tk)
    n_dst_pad = _ceil_to(N_dst, tile_dst)
    return dict(tile_dst=tile_dst, tk=tk, k_pad=k_pad, n_k=k_pad // tk,
                n_dst_pad=n_dst_pad, n_dst_tiles=n_dst_pad // tile_dst,
                xw_resident=xw_resident, vmem_limit=vmem_limit)


def _pack_direction(A, H_pad, tile_dst_req, tk_max, vmem_limit):
    """A: [R1, N_dst, N_src] dense per-rating edge counts (concrete, setup time)."""
    R1, N_dst, N_src = A.shape
    assert float(jnp.max(A)) <= 127.0, "edge multiplicity must fit in int8"
    N_src_pad = _ceil_to(N_src, 128)
    K128 = R1 * N_src_pad
    plan = _plan(N_dst, K128, H_pad, tile_dst_req, tk_max, vmem_limit)

    # [R1, N_dst, N_src] -> [N_dst_pad, R1 * N_src_pad] -> pad K -> int8.  Paid once.
    A_pad = jnp.pad(A, ((0, 0), (0, plan['n_dst_pad'] - N_dst),
                        (0, N_src_pad - N_src)))
    A_pk = jnp.transpose(A_pad, (1, 0, 2)).reshape(plan['n_dst_pad'], K128)
    A_pk = jnp.pad(A_pk, ((0, 0), (0, plan['k_pad'] - K128))).astype(jnp.int8)

    deg = A.sum(axis=(0, 2))                                  # total in-degree
    inv_deg = (1.0 / jnp.maximum(deg, 1.0)).reshape(N_dst, 1).astype(jnp.float32)
    inv_deg = _pad2d(inv_deg, plan['n_dst_pad'], 1)

    return dict(A=A_pk, inv_deg=inv_deg, R1=R1, N_dst=N_dst, N_src=N_src,
                N_src_pad=N_src_pad, K128=K128, H_pad=H_pad, **plan)


# --------------------------------------------------------------------------
# One GCMCConv forward (hot path): wrapper-side prep + pallas_call.
# --------------------------------------------------------------------------
def gcmc_conv(packed, W_r, x_src, x_dst, W_lin, b_lin):
    f32, bf16 = jnp.float32, jnp.bfloat16
    H = x_src.shape[1]
    H_pad, R1 = packed['H_pad'], packed['R1']
    N_src, N_src_pad = packed['N_src'], packed['N_src_pad']
    N_dst, n_dst_pad = packed['N_dst'], packed['n_dst_pad']
    tile_dst, tk, k_pad = packed['tile_dst'], packed['tk'], packed['k_pad']
    n_k, n_dst_tiles = packed['n_k'], packed['n_dst_tiles']
    xw_resident = packed['xw_resident']

    # Hoisted rating transform XW[r] = X_src @ W_r[r]^T, packed to the same
    # [K_pad, H_pad] contraction layout as A (f32 math, bf16 feed).
    XW = jnp.einsum('sh,rkh->rsk', x_src.astype(f32), W_r.astype(f32))
    XW = jnp.pad(XW, ((0, 0), (0, N_src_pad - N_src), (0, H_pad - H)))
    XW = XW.reshape(R1 * N_src_pad, H_pad)
    XW = jnp.pad(XW, ((0, k_pad - R1 * N_src_pad), (0, 0))).astype(bf16)

    # Loop-invariant self term X_dst @ W1^T + b (exact f32), plus W2^T (bf16 feed).
    self_term = x_dst.astype(f32) @ W_lin[:, :H].T.astype(f32) + b_lin.astype(f32)[None, :]
    self_p = _pad2d(self_term, n_dst_pad, H_pad)
    W2t_p = _pad2d(W_lin[:, H:].T.astype(f32), H_pad, H_pad).astype(bf16)

    if xw_resident:
        xw_spec = pl.BlockSpec((k_pad, H_pad), lambda d, k: (0, 0))   # fetched once
    else:
        xw_spec = pl.BlockSpec((tk, H_pad), lambda d, k: (k, 0))      # K-tiled stream

    grid_spec = pltpu.PrefetchScalarGridSpec(
        num_scalar_prefetch=0,
        grid=(n_dst_tiles, n_k),                       # contraction axis innermost
        in_specs=[
            pl.BlockSpec((tile_dst, tk), lambda d, k: (d, k)),        # A (int8)
            xw_spec,                                                  # XW (bf16)
            pl.BlockSpec((tile_dst, 1), lambda d, k: (d, 0)),         # 1/deg
            pl.BlockSpec((tile_dst, H_pad), lambda d, k: (d, 0)),     # self term
            pl.BlockSpec((H_pad, H_pad), lambda d, k: (0, 0)),        # W2^T
        ],
        out_specs=pl.BlockSpec((tile_dst, H_pad), lambda d, k: (d, 0)),
    )

    # Advisory cost so XLA can overlap the wrapper prep with the kernel.
    flops = 2 * n_dst_pad * k_pad * H_pad + 2 * n_dst_pad * H_pad * H_pad
    xw_reads = 1 if (xw_resident or n_k == 1) else n_dst_tiles
    bytes_accessed = (n_dst_pad * k_pad                       # A, int8
                      + xw_reads * k_pad * H_pad * 2          # XW, bf16
                      + 2 * n_dst_pad * H_pad * 4             # self + out, f32
                      + H_pad * H_pad * 2 + n_dst_pad * 4)

    out = pl.pallas_call(
        functools.partial(gcmc_kernel, tk=tk, slice_xw=(xw_resident and n_k > 1)),
        out_shape=jax.ShapeDtypeStruct((n_dst_pad, H_pad), f32),
        grid_spec=grid_spec,
        compiler_params=pltpu.CompilerParams(
            dimension_semantics=("parallel", "arbitrary"),
            vmem_limit_bytes=packed['vmem_limit']),
        cost_estimate=pl.CostEstimate(flops=flops, transcendentals=0,
                                      bytes_accessed=bytes_accessed),
    )(packed['A'], XW, packed['inv_deg'], self_p, W2t_p)

    return out[:N_dst, :H]


# --------------------------------------------------------------------------
# GCMCRating1 forward (embeddings + stacked bidirectional GCMC layers).
# --------------------------------------------------------------------------
def gcmc_rating1_forward(params, user_gender, item_genres, conv):
    # Embedding lookups (full graph: NID mapping is the identity).
    h_user = params['user_emb'] + params['gender_emb'][user_gender]
    h_item = params['item_emb'] + params['genre_emb'][item_genres]

    for layer in params['layers']:
        # 'watchedby': item -> user (dst=user); 'watched': user -> item (dst=item)
        new_user = conv(layer['watchedby'], h_item, h_user, 'user')
        new_item = conv(layer['watched'], h_user, h_item, 'item')
        h_user, h_item = new_user, new_item

    user_out = h_user @ params['W'].T + params['b_W']
    item_out = h_item @ params['V'].T + params['b_V']
    return user_out, item_out


def make_pallas_conv(edges_u, edges_i, ratings, n_user, n_item, R1, hidden,
                     *, tile_dst=512, tk_max=4096):
    """Densify + pack the per-rating adjacency ONCE per direction, then close over
    the packed int8 buffers so the hot path only streams them."""
    f32 = jnp.float32
    # user -> item adjacency per rating (dst = item), and its reverse.
    A_item = jnp.zeros((R1, n_item, n_user), f32).at[ratings, edges_i, edges_u].add(1.0)
    A_user = jnp.transpose(A_item, (0, 2, 1))

    H_pad = _ceil_to(hidden, 128)          # keep 128 lanes; wider only adds bytes
    vmem_limit = _vmem_limit_bytes()
    packed = {'user': _pack_direction(A_user, H_pad, tile_dst, tk_max, vmem_limit),
              'item': _pack_direction(A_item, H_pad, tile_dst, tk_max, vmem_limit)}

    def conv(p, x_src, x_dst, dst_type):
        return gcmc_conv(packed[dst_type], p['W_r'], x_src, x_dst,
                         p['W_lin'], p['b_lin'])
    return conv


def make_ref_conv(edges_u, edges_i, ratings, n_user, n_item):
    """Pure-JAX reproduction of the DGL/PyTorch GCMCConv semantics (f32)."""
    def conv(p, x_src, x_dst, dst_type):
        if dst_type == 'user':
            src_idx, dst_idx, n_dst = edges_i, edges_u, n_user
        else:
            src_idx, dst_idx, n_dst = edges_u, edges_i, n_item
        m = jnp.einsum('ehk,ek->eh', p['W_r'][ratings], x_src[src_idx])   # W_r @ h_src
        sums = jnp.zeros((n_dst, x_src.shape[1]), jnp.float32).at[dst_idx].add(m)
        cnt = jnp.zeros((n_dst,), jnp.float32).at[dst_idx].add(1.0)
        h_neigh = sums / jnp.maximum(cnt, 1.0)[:, None]                   # fn.mean
        z = jnp.concatenate([x_dst, h_neigh], axis=1) @ p['W_lin'].T + p['b_lin']
        return jnp.maximum(z, 0.0)                                        # relu(Linear)
    return conv


def init_params(key, num_users, num_items, hidden, num_ratings, num_layers,
                num_genders, num_genres):
    keys = iter(jax.random.split(key, 8 + 6 * num_layers))

    def rnd(shape, scale=1.0):
        return jax.random.normal(next(keys), shape, jnp.float32) * scale

    params = {
        'user_emb': rnd((num_users, hidden)),
        'item_emb': rnd((num_items, hidden)),
        'gender_emb': rnd((num_genders, hidden)),
        'genre_emb': rnd((num_genres, hidden)),
        'W': rnd((hidden, hidden), 0.1), 'b_W': rnd((hidden,), 0.1),
        'V': rnd((hidden, hidden), 0.1), 'b_V': rnd((hidden,), 0.1),
    }
    layers = []
    for _ in range(num_layers):
        layer = {}
        for d in ('watchedby', 'watched'):
            layer[d] = {
                'W_r': rnd((num_ratings + 1, hidden, hidden)),
                'W_lin': rnd((hidden, 2 * hidden), 0.1),
                'b_lin': rnd((hidden,), 0.1),
            }
        layers.append(layer)
    params['layers'] = layers
    return params


if __name__ == "__main__":
    hidden = 32
    num_ratings = 4          # W_r holds num_ratings + 1 = 5 matrices
    num_layers = 2
    n_user, n_item = 24, 40
    num_genders, num_genres = 2, 6
    n_edges = 96

    key = jax.random.PRNGKey(0)
    kp, kg, kn, ku, ki, kr = jax.random.split(key, 6)

    params = init_params(kp, n_user, n_item, hidden, num_ratings, num_layers,
                         num_genders, num_genres)
    user_gender = jax.random.randint(kg, (n_user,), 0, num_genders)
    item_genres = jax.random.randint(kn, (n_item,), 0, num_genres)
    edges_u = jax.random.randint(ku, (n_edges,), 0, n_user)      # user endpoint
    edges_i = jax.random.randint(ki, (n_edges,), 0, n_item)      # item endpoint
    ratings = jax.random.randint(kr, (n_edges,), 0, num_ratings + 1)

    pallas_conv = make_pallas_conv(edges_u, edges_i, ratings, n_user, n_item,
                                   num_ratings + 1, hidden)
    ref_conv = make_ref_conv(edges_u, edges_i, ratings, n_user, n_item)

    u_out, i_out = gcmc_rating1_forward(params, user_gender, item_genres, pallas_conv)
    u_out, i_out = jax.block_until_ready((u_out, i_out))

    u_ref, i_ref = gcmc_rating1_forward(params, user_gender, item_genres, ref_conv)

    assert u_out.shape == (n_user, hidden) and i_out.shape == (n_item, hidden)
    for got, ref, tag in ((u_out, u_ref, "user"), (i_out, i_ref, "item")):
        rel = jnp.linalg.norm(got - ref) / (jnp.linalg.norm(ref) + 1e-6)
        assert rel < 3e-2, f"{tag} embeddings rel error {rel}"   # bf16-feed tolerance

    print("KERNEL_OK")
</pallas_src>

<mosaic_0001>
module attributes {stable_mosaic.version = 11 : i64} {
  func.func @gcmc_kernel(%arg0: i32, %arg1: i32, %arg2: memref<32x640xi8, #tpu.memory_space<vmem>>, %arg3: memref<640x128xbf16, #tpu.memory_space<vmem>>, %arg4: memref<32x1xf32, #tpu.memory_space<vmem>>, %arg5: memref<32x128xf32, #tpu.memory_space<vmem>>, %arg6: memref<128x128xbf16, #tpu.memory_space<vmem>>, %arg7: memref<32x128xf32, #tpu.memory_space<vmem>>) attributes {dimension_semantics = [#tpu.dimension_semantics<parallel>, #tpu.dimension_semantics<arbitrary>], iteration_bounds = array<i64: 1, 1>, scalar_prefetch = 0 : i64, scratch_operands = 0 : i64, tpu.core_type = #tpu.core_type<tc>, window_params = [{transform_indices = @transform_0, window_bounds = array<i64: 32, 640>}, {pipeline_mode = #tpu.pipeline_mode<synchronous>, transform_indices = @transform_1, window_bounds = array<i64: 640, 128>}, {transform_indices = @transform_2, window_bounds = array<i64: 32, 1>}, {transform_indices = @transform_3, window_bounds = array<i64: 32, 128>}, {pipeline_mode = #tpu.pipeline_mode<synchronous>, transform_indices = @transform_4, window_bounds = array<i64: 128, 128>}, {transform_indices = @transform_5, window_bounds = array<i64: 32, 128>}]} {
    %c0_i32 = arith.constant 0 : i32
    %0 = arith.cmpi eq, %arg1, %c0_i32 : i32
    %1 = arith.extui %0 : i1 to i32
    %c0_i32_0 = arith.constant 0 : i32
    %2 = arith.cmpi ne, %1, %c0_i32_0 : i32
    scf.if %2 {
      %cst_10 = arith.constant 0.000000e+00 : f32
      %14 = vector.broadcast %cst_10 : f32 to vector<32x128xf32>
      %c0_11 = arith.constant 0 : index
      %c0_12 = arith.constant 0 : index
      %15 = vector.load %arg7[%c0_11, %c0_12] : memref<32x128xf32, #tpu.memory_space<vmem>>, vector<32x128xf32>
      tpu.vector_store %arg7[%c0_11, %c0_12], %14 {strides = array<i32>} : memref<32x128xf32, #tpu.memory_space<vmem>>, vector<32x128xf32>,
    } else {
    }
    %c0 = arith.constant 0 : index
    %c0_1 = arith.constant 0 : index
    %3 = vector.load %arg3[%c0, %c0_1] : memref<640x128xbf16, #tpu.memory_space<vmem>>, vector<640x128xbf16>
    %c0_2 = arith.constant 0 : index
    %c0_3 = arith.constant 0 : index
    %4 = vector.load %arg2[%c0_2, %c0_3] : memref<32x640xi8, #tpu.memory_space<vmem>>, vector<32x640xi8>
    %5 = arith.sitofp %4 : vector<32x640xi8> to vector<32x640xf32>
    %6 = arith.truncf %5 : vector<32x640xf32> to vector<32x640xbf16>
    %c0_4 = arith.constant 0 : index
    %c0_5 = arith.constant 0 : index
    %7 = vector.load %arg7[%c0_4, %c0_5] : memref<32x128xf32, #tpu.memory_space<vmem>>, vector<32x128xf32>
    %cst = arith.constant dense<0.000000e+00> : vector<32x128xf32>
    %8 = tpu.matmul %6, %3, %cst {dimension_numbers = #tpu.dot_dimension_numbers<[1], [0], [0], [1], [0, 0, 1, 1], [], []>} : vector<32x640xbf16>, vector<640x128xbf16>, vector<32x128xf32> -> vector<32x128xf32>
    %9 = arith.addf %7, %8 : vector<32x128xf32>
    %c0_6 = arith.constant 0 : index
    %c0_7 = arith.constant 0 : index
    %10 = vector.load %arg7[%c0_6, %c0_7] : memref<32x128xf32, #tpu.memory_space<vmem>>, vector<32x128xf32>
    tpu.vector_store %arg7[%c0_6, %c0_7], %9 {strides = array<i32>} : memref<32x128xf32, #tpu.memory_space<vmem>>, vector<32x128xf32>,
    %c0_i32_8 = arith.constant 0 : i32
    %11 = arith.cmpi eq, %arg1, %c0_i32_8 : i32
    %12 = arith.extui %11 : i1 to i32
    %c0_i32_9 = arith.constant 0 : i32
    %13 = arith.cmpi ne, %12, %c0_i32_9 : i32
    scf.if %13 {
      %c0_10 = arith.constant 0 : index
      %c0_11 = arith.constant 0 : index
      %14 = vector.load %arg7[%c0_10, %c0_11] : memref<32x128xf32, #tpu.memory_space<vmem>>, vector<32x128xf32>
      %c0_12 = arith.constant 0 : index
      %c0_13 = arith.constant 0 : index
      %15 = vector.load %arg4[%c0_12, %c0_13] : memref<32x1xf32, #tpu.memory_space<vmem>>, vector<32x1xf32>
      %16 = vector.broadcast %15 : vector<32x1xf32> to vector<32x128xf32>
      %17 = arith.mulf %14, %16 : vector<32x128xf32>
      %c0_14 = arith.constant 0 : index
      %c0_15 = arith.constant 0 : index
      %18 = vector.load %arg5[%c0_14, %c0_15] : memref<32x128xf32, #tpu.memory_space<vmem>>, vector<32x128xf32>
      %19 = arith.truncf %17 : vector<32x128xf32> to vector<32x128xbf16>
      %c0_16 = arith.constant 0 : index
      %c0_17 = arith.constant 0 : index
      %20 = vector.load %arg6[%c0_16, %c0_17] : memref<128x128xbf16, #tpu.memory_space<vmem>>, vector<128x128xbf16>
      %cst_18 = arith.constant dense<0.000000e+00> : vector<32x128xf32>
      %21 = tpu.matmul %19, %20, %cst_18 {dimension_numbers = #tpu.dot_dimension_numbers<[1], [0], [0], [1], [0, 0, 1, 1], [], []>} : vector<32x128xbf16>, vector<128x128xbf16>, vector<32x128xf32> -> vector<32x128xf32>
      %22 = arith.addf %18, %21 : vector<32x128xf32>
      %cst_19 = arith.constant 0.000000e+00 : f32
      %23 = vector.broadcast %cst_19 : f32 to vector<32x128xf32>
      %24 = arith.maximumf %22, %23 : vector<32x128xf32>
      %c0_20 = arith.constant 0 : index
      %c0_21 = arith.constant 0 : index
      %25 = vector.load %arg7[%c0_20, %c0_21] : memref<32x128xf32, #tpu.memory_space<vmem>>, vector<32x128xf32>
      tpu.vector_store %arg7[%c0_20, %c0_21], %24 {strides = array<i32>} : memref<32x128xf32, #tpu.memory_space<vmem>>, vector<32x128xf32>,
    } else {
    }
    return
  }
  func.func @transform_0(%arg0: i32, %arg1: i32) -> (i32, i32) {
    %c0_i32 = arith.constant 0 : i32
    return %arg0, %arg1 : i32, i32
  }
  func.func @transform_1(%arg0: i32, %arg1: i32) -> (i32, i32) {
    %c0_i32 = arith.constant 0 : i32
    %c0_i32_0 = arith.constant 0 : i32
    %c0_i32_1 = arith.constant 0 : i32
    return %c0_i32, %c0_i32_0 : i32, i32
  }
  func.func @transform_2(%arg0: i32, %arg1: i32) -> (i32, i32) {
    %c0_i32 = arith.constant 0 : i32
    %c0_i32_0 = arith.constant 0 : i32
    return %arg0, %c0_i32 : i32, i32
  }
  func.func @transform_3(%arg0: i32, %arg1: i32) -> (i32, i32) {
    %c0_i32 = arith.constant 0 : i32
    %c0_i32_0 = arith.constant 0 : i32
    return %arg0, %c0_i32 : i32, i32
  }
  func.func @transform_4(%arg0: i32, %arg1: i32) -> (i32, i32) {
    %c0_i32 = arith.constant 0 : i32
    %c0_i32_0 = arith.constant 0 : i32
    %c0_i32_1 = arith.constant 0 : i32
    return %c0_i32, %c0_i32_0 : i32, i32
  }
  func.func @transform_5(%arg0: i32, %arg1: i32) -> (i32, i32) {
    %c0_i32 = arith.constant 0 : i32
    %c0_i32_0 = arith.constant 0 : i32
    return %arg0, %c0_i32 : i32, i32
  }
}

</mosaic_0001>

<llo_original>
// kernel: tpu_custom_call.1
$region0: #{tpu_custom_call.1}
  #allocation0 [shape = 'u32[]', space=smem, size = 0x4, offset = 0x4, fixed_abs, tag = 'smem constant byte address 0x4 - core index']
  #allocation1 [shape = 'u32[72,128]{1,0:T(1,128)}', space=vmem, size = 0x9000, scoped, tag = 'internal scratch']
  %s0 = inlined_call_operand.hbm [shape: s8[32,640], index: 0, kind: input, shape index: {}]
  %s1 = inlined_call_operand.hbm [shape: bf16[640,128], index: 1, kind: input, shape index: {}]
  %s2 = inlined_call_operand.vmem [shape: f32[32,1], index: 2, kind: input, shape index: {}]
  %s3 = inlined_call_operand.vmem [shape: f32[32,128], index: 3, kind: input, shape index: {}]
  %s4 = inlined_call_operand.hbm [shape: bf16[128,128], index: 4, kind: input, shape index: {}]
  %s5 = inlined_call_operand.hbm [shape: f32[32,128], index: 5, kind: output, shape index: {}]
  %s6 = sld [smem:[#allocation0]]
  $region50: #{tpu_custom_call.1} parent=0
    _
  %s8 = ssub.s32 1, %s6
  %s9 = scalar_select 0, %s8, %s6
  $region1: #{tpu_custom_call.1} parent=0
    #allocation2 [shape = 'u8[20480]{0}', space=vmem, size = 0x5000, scoped, tag = 'input window, operand 0, single buffered']
    #allocation3 [shape = 's32[1]{0}', space=sflag, size = 0x4, scoped, tag = 'scoped memory for tpu_custom_call.1']
    #allocation4 [shape = 's32[1]{0}', space=sflag, size = 0x4, scoped, tag = 'scoped memory for tpu_custom_call.1']
    #allocation5 [shape = 'u8[163840]{0}', space=vmem, size = 0x28000, scoped, tag = 'input window, operand 1, single buffered']
    #allocation6 [shape = 's32[1]{0}', space=sflag, size = 0x4, scoped, tag = 'scoped memory for tpu_custom_call.1']
    #allocation7 [shape = 'u8[32768]{0}', space=vmem, size = 0x8000, scoped, tag = 'input window, operand 4, single buffered']
    #allocation8 [shape = 'u8[16384]{0}', space=vmem, size = 0x4000, scoped, tag = 'output window, operand 0, single buffered']
    %10 = vsyncpa [#allocation3], 0
    %11 = vsyncpa [#allocation6], 0
    %12 = vsyncpa [#allocation4], 0
    // Predicated region
    $region2: #{tpu_custom_call.1} parent=1 // pred_check
      _
    $region3: #{tpu_custom_call.1} parent=1 // pred_check_branch
      %14 = sbr.rel (0) target = $region5
    $region4: #{tpu_custom_call.1} parent=1 // pred_region
      %16 = vsyncadd [#allocation3], 0
      %s18 = sshll.u32 %s0, 4
      %s19 = int_to_ptr.hbm [resolvable:$true] %s18
      %s20 = sshll.u32 [#allocation2], 4
      %s21 = int_to_ptr.vmem [resolvable:$true] %s20
      %23 = dma.hbm_to_vmem [thread:$0]  %s19, 640, %s21, [#allocation3]
    $region5: #{tpu_custom_call.1} parent=1 // pred_fallthru
      _
    // Predicated region
    $region6: #{tpu_custom_call.1} parent=1 // pred_check
      _
    $region7: #{tpu_custom_call.1} parent=1 // pred_check_branch
      %25 = sbr.rel (0) target = $region9
    $region8: #{tpu_custom_call.1} parent=1 // pred_region
      %27 = vsyncadd [#allocation6], 0
      %s28 = sshll.u32 %s1, 4
      %s29 = int_to_ptr.hbm [resolvable:$true] %s28
      %s30 = sshll.u32 [#allocation5], 4
      %s31 = int_to_ptr.vmem [resolvable:$true] %s30
      %36 = dma.hbm_to_vmem [thread:$0]  %s29, 5120, %s31, [#allocation6], 64, 64, 4
    $region9: #{tpu_custom_call.1} parent=1 // pred_fallthru
      _
    // Predicated region
    $region10: #{tpu_custom_call.1} parent=1 // pred_check
      _
    $region11: #{tpu_custom_call.1} parent=1 // pred_check_branch
      %38 = sbr.rel (0) target = $region13
    $region12: #{tpu_custom_call.1} parent=1 // pred_region
      _
    $region13: #{tpu_custom_call.1} parent=1 // pred_fallthru
      _
    // Predicated region
    $region14: #{tpu_custom_call.1} parent=1 // pred_check
      _
    $region15: #{tpu_custom_call.1} parent=1 // pred_check_branch
      %40 = sbr.rel (0) target = $region17
    $region16: #{tpu_custom_call.1} parent=1 // pred_region
      _
    $region17: #{tpu_custom_call.1} parent=1 // pred_fallthru
      _
    // Predicated region
    $region18: #{tpu_custom_call.1} parent=1 // pred_check
      _
    $region19: #{tpu_custom_call.1} parent=1 // pred_check_branch
      %42 = sbr.rel (0) target = $region21
    $region20: #{tpu_custom_call.1} parent=1 // pred_region
      %44 = vsyncadd [#allocation6], 0
      %s45 = sshll.u32 %s4, 4
      %s46 = int_to_ptr.hbm [resolvable:$true] %s45
      %s47 = sshll.u32 [#allocation7], 4
      %s48 = int_to_ptr.vmem [resolvable:$true] %s47
      %53 = dma.hbm_to_vmem [thread:$0]  %s46, 1024, %s48, [#allocation6], 64, 64, 4
    $region21: #{tpu_custom_call.1} parent=1 // pred_fallthru
      _
    // Predicated region
    $region22: #{tpu_custom_call.1} parent=1 // pred_check
      _
    $region23: #{tpu_custom_call.1} parent=1 // pred_check_branch
      %55 = sbr.rel (0) target = $region25
    $region24: #{tpu_custom_call.1} parent=1 // pred_region
      %57 = dma.done [#allocation3], 640
    $region25: #{tpu_custom_call.1} parent=1 // pred_fallthru
      _
    // Predicated region
    $region26: #{tpu_custom_call.1} parent=1 // pred_check
      _
    $region27: #{tpu_custom_call.1} parent=1 // pred_check_branch
      %59 = sbr.rel (0) target = $region29
    $region28: #{tpu_custom_call.1} parent=1 // pred_region
      %61 = dma.done [#allocation6], 5120
    $region29: #{tpu_custom_call.1} parent=1 // pred_fallthru
      _
    // Predicated region
    $region30: #{tpu_custom_call.1} parent=1 // pred_check
      _
    $region31: #{tpu_custom_call.1} parent=1 // pred_check_branch
      %63 = sbr.rel (0) target = $region33
    $region32: #{tpu_custom_call.1} parent=1 // pred_region
      %65 = dma.done [#allocation6], 1024
    $region33: #{tpu_custom_call.1} parent=1 // pred_fallthru
      _
    %p66 = scmp.eq.s32.totalorder 0, 0
    // Predicated region
    $region34: #{tpu_custom_call.1} parent=1 // pred_check
      %p67 = pneg %p66
    $region35: #{tpu_custom_call.1} parent=1 // pred_check_branch
      %69 = sbr.rel (%p67) target = $region37
    $region36: #{tpu_custom_call.1} parent=1 // pred_region
      %70 = vst [vmem:[#allocation8] sm:$0xff] 0.0
      %71 = vst [vmem:[#allocation8 + $0x8] sm:$0xff] 0.0
      %72 = vst [vmem:[#allocation8 + $0x10] sm:$0xff] 0.0
      %73 = vst [vmem:[#allocation8 + $0x18] sm:$0xff] 0.0
    $region37: #{tpu_custom_call.1} parent=1 // pred_fallthru
      _
    %v74 = vld [vmem:[#allocation5] sm:$0xf]
    %v75 = vld [vmem:[#allocation5 + $0x4] sm:$0xf]
    %v76 = vld [vmem:[#allocation5 + $0x8] sm:$0xf]
    %v77 = vld [vmem:[#allocation5 + $0xc] sm:$0xf]
    %v78 = vld [vmem:[#allocation5 + $0x10] sm:$0xf]
    %v79 = vld [vmem:[#allocation5 + $0x14] sm:$0xf]
    %v80 = vld [vmem:[#allocation5 + $0x18] sm:$0xf]
    %v81 = vld [vmem:[#allocation5 + $0x1c] sm:$0xf]
    %v82 = vld [vmem:[#allocation5 + $0x20] sm:$0xf]
    %v83 = vld [vmem:[#allocation5 + $0x24] sm:$0xf]
    %v84 = vld [vmem:[#allocation5 + $0x28] sm:$0xf]
    %v85 = vld [vmem:[#allocation5 + $0x2c] sm:$0xf]
    %v86 = vld [vmem:[#allocation5 + $0x30] sm:$0xf]
    %v87 = vld [vmem:[#allocation5 + $0x34] sm:$0xf]
    %v88 = vld [vmem:[#allocation5 + $0x38] sm:$0xf]
    %v89 = vld [vmem:[#allocation5 + $0x3c] sm:$0xf]
    %v90 = vld [vmem:[#allocation5 + $0x40] sm:$0xf]
    %v91 = vld [vmem:[#allocation5 + $0x44] sm:$0xf]
    %v92 = vld [vmem:[#allocation5 + $0x48] sm:$0xf]
    %v93 = vld [vmem:[#allocation5 + $0x4c] sm:$0xf]
    %v94 = vld [vmem:[#allocation5 + $0x50] sm:$0xf]
    %v95 = vld [vmem:[#allocation5 + $0x54] sm:$0xf]
    %v96 = vld [vmem:[#allocation5 + $0x58] sm:$0xf]
    %v97 = vld [vmem:[#allocation5 + $0x5c] sm:$0xf]
    %v98 = vld [vmem:[#allocation5 + $0x60] sm:$0xf]
    %v99 = vld [vmem:[#allocation5 + $0x64] sm:$0xf]
    %v100 = vld [vmem:[#allocation5 + $0x68] sm:$0xf]
    %v101 = vld [vmem:[#allocation5 + $0x6c] sm:$0xf]
    %v102 = vld [vmem:[#allocation5 + $0x70] sm:$0xf]
    %v103 = vld [vmem:[#allocation5 + $0x74] sm:$0xf]
    %v104 = vld [vmem:[#allocation5 + $0x78] sm:$0xf]
    %v105 = vld [vmem:[#allocation5 + $0x7c] sm:$0xf]
    %v106 = vld [vmem:[#allocation5 + $0x80] sm:$0xf]
    %v107 = vld [vmem:[#allocation5 + $0x84] sm:$0xf]
    %v108 = vld [vmem:[#allocation5 + $0x88] sm:$0xf]
    %v109 = vld [vmem:[#allocation5 + $0x8c] sm:$0xf]
    %v110 = vld [vmem:[#allocation5 + $0x90] sm:$0xf]
    %v111 = vld [vmem:[#allocation5 + $0x94] sm:$0xf]
    %v112 = vld [vmem:[#allocation5 + $0x98] sm:$0xf]
    %v113 = vld [vmem:[#allocation5 + $0x9c] sm:$0xf]
    %v114 = vld [vmem:[#allocation5 + $0xa0] sm:$0xf]
    %v115 = vld [vmem:[#allocation5 + $0xa4] sm:$0xf]
    %v116 = vld [vmem:[#allocation5 + $0xa8] sm:$0xf]
    %v117 = vld [vmem:[#allocation5 + $0xac] sm:$0xf]
    %v118 = vld [vmem:[#allocation5 + $0xb0] sm:$0xf]
    %v119 = vld [vmem:[#allocation5 + $0xb4] sm:$0xf]
    %v120 = vld [vmem:[#allocation5 + $0xb8] sm:$0xf]
    %v121 = vld [vmem:[#allocation5 + $0xbc] sm:$0xf]
    %v122 = vld [vmem:[#allocation5 + $0xc0] sm:$0xf]
    %v123 = vld [vmem:[#allocation5 + $0xc4] sm:$0xf]
    %v124 = vld [vmem:[#allocation5 + $0xc8] sm:$0xf]
    %v125 = vld [vmem:[#allocation5 + $0xcc] sm:$0xf]
    %v126 = vld [vmem:[#allocation5 + $0xd0] sm:$0xf]
    %v127 = vld [vmem:[#allocation5 + $0xd4] sm:$0xf]
    %v128 = vld [vmem:[#allocation5 + $0xd8] sm:$0xf]
    %v129 = vld [vmem:[#allocation5 + $0xdc] sm:$0xf]
    %v130 = vld [vmem:[#allocation5 + $0xe0] sm:$0xf]
    %v131 = vld [vmem:[#allocation5 + $0xe4] sm:$0xf]
    %v132 = vld [vmem:[#allocation5 + $0xe8] sm:$0xf]
    %v133 = vld [vmem:[#allocation5 + $0xec] sm:$0xf]
    %v134 = vld [vmem:[#allocation5 + $0xf0] sm:$0xf]
    %v135 = vld [vmem:[#allocation5 + $0xf4] sm:$0xf]
    %v136 = vld [vmem:[#allocation5 + $0xf8] sm:$0xf]
    %v137 = vld [vmem:[#allocation5 + $0xfc] sm:$0xf]
    %v138 = vld [vmem:[#allocation5 + $0x100] sm:$0xf]
    %v139 = vld [vmem:[#allocation5 + $0x104] sm:$0xf]
    %v140 = vld [vmem:[#allocation5 + $0x108] sm:$0xf]
    %v141 = vld [vmem:[#allocation5 + $0x10c] sm:$0xf]
    %v142 = vld [vmem:[#allocation5 + $0x110] sm:$0xf]
    %v143 = vld [vmem:[#allocation5 + $0x114] sm:$0xf]
    %v144 = vld [vmem:[#allocation5 + $0x118] sm:$0xf]
    %v145 = vld [vmem:[#allocation5 + $0x11c] sm:$0xf]
    %v146 = vld [vmem:[#allocation5 + $0x120] sm:$0xf]
    %v147 = vld [vmem:[#allocation5 + $0x124] sm:$0xf]
    %v148 = vld [vmem:[#allocation5 + $0x128] sm:$0xf]
    %v149 = vld [vmem:[#allocation5 + $0x12c] sm:$0xf]
    %v150 = vld [vmem:[#allocation5 + $0x130] sm:$0xf]
    %v151 = vld [vmem:[#allocation5 + $0x134] sm:$0xf]
    %v152 = vld [vmem:[#allocation5 + $0x138] sm:$0xf]
    %v153 = vld [vmem:[#allocation5 + $0x13c] sm:$0xf]
    %v154 = vld [vmem:[#allocation2] sm:$0xff]
    %v155 = vld [vmem:[#allocation2 + $0x8] sm:$0xff]
    %v156 = vld [vmem:[#allocation2 + $0x10] sm:$0xff]
    %v157 = vld [vmem:[#allocation2 + $0x18] sm:$0xff]
    %v158 = vld [vmem:[#allocation2 + $0x20] sm:$0xff]
    %v159 = vunpack.c.0.s8 %v154
    %v160 = vunpack.c.0.s8 %v155
    %v161 = vunpack.c.0.s8 %v156
    %v162 = vunpack.c.0.s8 %v157
    %v163 = vunpack.c.0.s8 %v158
    %v164 = vunpack.c.1.s8 %v154
    %v165 = vunpack.c.1.s8 %v155
    %v166 = vunpack.c.1.s8 %v156
    %v167 = vunpack.c.1.s8 %v157
    %v168 = vunpack.c.1.s8 %v158
    %v169 = vunpack.c.2.s8 %v154
    %v170 = vunpack.c.2.s8 %v155
    %v171 = vunpack.c.2.s8 %v156
    %v172 = vunpack.c.2.s8 %v157
    %v173 = vunpack.c.2.s8 %v158
    %v174 = vunpack.c.3.s8 %v154
    %v175 = vunpack.c.3.s8 %v155
    %v176 = vunpack.c.3.s8 %v156
    %v177 = vunpack.c.3.s8 %v157
    %v178 = vunpack.c.3.s8 %v158
    %v179 = vcvt.s32.f32 %v159
    %v180 = vcvt.s32.f32 %v160
    %v181 = vcvt.s32.f32 %v161
    %v182 = vcvt.s32.f32 %v162
    %v183 = vcvt.s32.f32 %v163
    %v184 = vcvt.s32.f32 %v164
    %v185 = vcvt.s32.f32 %v165
    %v186 = vcvt.s32.f32 %v166
    %v187 = vcvt.s32.f32 %v167
    %v188 = vcvt.s32.f32 %v168
    %v189 = vcvt.s32.f32 %v169
    %v190 = vcvt.s32.f32 %v170
    %v191 = vcvt.s32.f32 %v171
    %v192 = vcvt.s32.f32 %v172
    %v193 = vcvt.s32.f32 %v173
    %v194 = vcvt.s32.f32 %v174
    %v195 = vcvt.s32.f32 %v175
    %v196 = vcvt.s32.f32 %v176
    %v197 = vcvt.s32.f32 %v177
    %v198 = vcvt.s32.f32 %v178
    %v199 = vpack.c.bf16 %v184, %v179
    %v200 = vpack.c.bf16 %v185, %v180
    %v201 = vpack.c.bf16 %v186, %v181
    %v202 = vpack.c.bf16 %v187, %v182
    %v203 = vpack.c.bf16 %v188, %v183
    %v204 = vpack.c.bf16 %v194, %v189
    %v205 = vpack.c.bf16 %v195, %v190
    %v206 = vpack.c.bf16 %v196, %v191
    %v207 = vpack.c.bf16 %v197, %v192
    %v208 = vpack.c.bf16 %v198, %v193
    %v209 = vld [vmem:[#allocation8] sm:$0xff]
    %v210 = vld [vmem:[#allocation8 + $0x8] sm:$0xff]
    %v211 = vld [vmem:[#allocation8 + $0x10] sm:$0xff]
    %v212 = vld [vmem:[#allocation8 + $0x18] sm:$0xff]
    %v293 = vunpack.c.l.b16 %v74
    %v294 = vunpack.c.l.b16 %v75
    %v295 = vunpack.c.l.b16 %v76
    %v296 = vunpack.c.l.b16 %v77
    %v297 = vunpack.c.l.b16 %v78
    %v298 = vunpack.c.l.b16 %v79
    %v299 = vunpack.c.l.b16 %v80
    %v300 = vunpack.c.l.b16 %v81
    %v301 = vunpack.c.l.b16 %v82
    %v302 = vunpack.c.l.b16 %v83
    %v303 = vunpack.c.l.b16 %v84
    %v304 = vunpack.c.l.b16 %v85
    %v305 = vunpack.c.l.b16 %v86
    %v306 = vunpack.c.l.b16 %v87
    %v307 = vunpack.c.l.b16 %v88
    %v308 = vunpack.c.l.b16 %v89
    %v309 = vunpack.c.l.b16 %v90
    %v310 = vunpack.c.l.b16 %v91
    %v311 = vunpack.c.l.b16 %v92
    %v312 = vunpack.c.l.b16 %v93
    %v313 = vunpack.c.l.b16 %v94
    %v314 = vunpack.c.l.b16 %v95
    %v315 = vunpack.c.l.b16 %v96
    %v316 = vunpack.c.l.b16 %v97
    %v317 = vunpack.c.l.b16 %v98
    %v318 = vunpack.c.l.b16 %v99
    %v319 = vunpack.c.l.b16 %v100
    %v320 = vunpack.c.l.b16 %v101
    %v321 = vunpack.c.l.b16 %v102
    %v322 = vunpack.c.l.b16 %v103
    %v323 = vunpack.c.l.b16 %v104
    %v324 = vunpack.c.l.b16 %v105
    %v325 = vunpack.c.l.b16 %v106
    %v326 = vunpack.c.l.b16 %v107
    %v327 = vunpack.c.l.b16 %v108
    %v328 = vunpack.c.l.b16 %v109
    %v329 = vunpack.c.l.b16 %v110
    %v330 = vunpack.c.l.b16 %v111
    %v331 = vunpack.c.l.b16 %v112
    %v332 = vunpack.c.l.b16 %v113
    %v333 = vunpack.c.l.b16 %v114
    %v334 = vunpack.c.l.b16 %v115
    %v335 = vunpack.c.l.b16 %v116
    %v336 = vunpack.c.l.b16 %v117
    %v337 = vunpack.c.l.b16 %v118
    %v338 = vunpack.c.l.b16 %v119
    %v339 = vunpack.c.l.b16 %v120
    %v340 = vunpack.c.l.b16 %v121
    %v341 = vunpack.c.l.b16 %v122
    %v342 = vunpack.c.l.b16 %v123
    %v343 = vunpack.c.l.b16 %v124
    %v344 = vunpack.c.l.b16 %v125
    %v345 = vunpack.c.l.b16 %v126
    %v346 = vunpack.c.l.b16 %v127
    %v347 = vunpack.c.l.b16 %v128
    %v348 = vunpack.c.l.b16 %v129
    %v349 = vunpack.c.l.b16 %v130
    %v350 = vunpack.c.l.b16 %v131
    %v351 = vunpack.c.l.b16 %v132
    %v352 = vunpack.c.l.b16 %v133
    %v353 = vunpack.c.l.b16 %v134
    %v354 = vunpack.c.l.b16 %v135
    %v355 = vunpack.c.l.b16 %v136
    %v356 = vunpack.c.l.b16 %v137
    %v357 = vunpack.c.l.b16 %v138
    %v358 = vunpack.c.l.b16 %v139
    %v359 = vunpack.c.l.b16 %v140
    %v360 = vunpack.c.l.b16 %v141
    %v361 = vunpack.c.l.b16 %v142
    %v362 = vunpack.c.l.b16 %v143
    %v363 = vunpack.c.l.b16 %v144
    %v364 = vunpack.c.l.b16 %v145
    %v365 = vunpack.c.l.b16 %v146
    %v366 = vunpack.c.l.b16 %v147
    %v367 = vunpack.c.l.b16 %v148
    %v368 = vunpack.c.l.b16 %v149
    %v369 = vunpack.c.l.b16 %v150
    %v370 = vunpack.c.l.b16 %v151
    %v371 = vunpack.c.l.b16 %v152
    %v372 = vunpack.c.l.b16 %v153
    %v373 = vpack.c.b16 %v294, %v293
    %v374 = vpack.c.b16 %v296, %v295
    %v375 = vpack.c.b16 %v298, %v297
    %v376 = vpack.c.b16 %v300, %v299
    %v377 = vpack.c.b16 %v302, %v301
    %v378 = vpack.c.b16 %v304, %v303
    %v379 = vpack.c.b16 %v306, %v305
    %v380 = vpack.c.b16 %v308, %v307
    %v381 = vpack.c.b16 %v310, %v309
    %v382 = vpack.c.b16 %v312, %v311
    %v383 = vpack.c.b16 %v314, %v313
    %v384 = vpack.c.b16 %v316, %v315
    %v385 = vpack.c.b16 %v318, %v317
    %v386 = vpack.c.b16 %v320, %v319
    %v387 = vpack.c.b16 %v322, %v321
    %v388 = vpack.c.b16 %v324, %v323
    %v389 = vpack.c.b16 %v326, %v325
    %v390 = vpack.c.b16 %v328, %v327
    %v391 = vpack.c.b16 %v330, %v329
    %v392 = vpack.c.b16 %v332, %v331
    %v393 = vpack.c.b16 %v334, %v333
    %v394 = vpack.c.b16 %v336, %v335
    %v395 = vpack.c.b16 %v338, %v337
    %v396 = vpack.c.b16 %v340, %v339
    %v397 = vpack.c.b16 %v342, %v341
    %v398 = vpack.c.b16 %v344, %v343
    %v399 = vpack.c.b16 %v346, %v345
    %v400 = vpack.c.b16 %v348, %v347
    %v401 = vpack.c.b16 %v350, %v349
    %v402 = vpack.c.b16 %v352, %v351
    %v403 = vpack.c.b16 %v354, %v353
    %v404 = vpack.c.b16 %v356, %v355
    %v405 = vpack.c.b16 %v358, %v357
    %v406 = vpack.c.b16 %v360, %v359
    %v407 = vpack.c.b16 %v362, %v361
    %v408 = vpack.c.b16 %v364, %v363
    %v409 = vpack.c.b16 %v366, %v365
    %v410 = vpack.c.b16 %v368, %v367
    %v411 = vpack.c.b16 %v370, %v369
    %v412 = vpack.c.b16 %v372, %v371
    %453 = vmatpush.bf16.msra.mxu0 %v380
    %454 = vmatpush.bf16.msra.mxu0 %v379
    %455 = vmatpush.bf16.msra.mxu0 %v378
    %456 = vmatpush.bf16.msra.mxu0 %v377
    %457 = vmatpush.bf16.msra.mxu0 %v376
    %458 = vmatpush.bf16.msra.mxu0 %v375
    %459 = vmatpush.bf16.msra.mxu0 %v374
    %460 = vmatpush.bf16.msra.mxu0 %v373
    %461 = vmatmul.bf16.gmra.mxu0 %v199
    %v462 = vpop.f32.mrf.mxu0
    %v463 = vadd.f32 0.0, %v462
    %v464 = vpop.f32.mrf.mxu0
    %v465 = vadd.f32 0.0, %v464
    %466 = vmatmul.bf16.gmra.mxu0 %v204
    %v467 = vpop.f32.mrf.mxu0
    %v468 = vadd.f32 0.0, %v467
    %v469 = vpop.f32.mrf.mxu0
    %v470 = vadd.f32 0.0, %v469
    %471 = vdwg.mxu0
    %472 = vmatpush.bf16.msra.mxu0 %v388
    %473 = vmatpush.bf16.msra.mxu0 %v387
    %474 = vmatpush.bf16.msra.mxu0 %v386
    %475 = vmatpush.bf16.msra.mxu0 %v385
    %476 = vmatpush.bf16.msra.mxu0 %v384
    %477 = vmatpush.bf16.msra.mxu0 %v383
    %478 = vmatpush.bf16.msra.mxu0 %v382
    %479 = vmatpush.bf16.msra.mxu0 %v381
    %480 = vmatmul.bf16.gmra.mxu0 %v200
    %v481 = vpop.f32.mrf.mxu0
    %v482 = vadd.f32 %v463, %v481
    %v483 = vpop.f32.mrf.mxu0
    %v484 = vadd.f32 %v465, %v483
    %485 = vmatmul.bf16.gmra.mxu0 %v205
    %v486 = vpop.f32.mrf.mxu0
    %v487 = vadd.f32 %v468, %v486
    %v488 = vpop.f32.mrf.mxu0
    %v489 = vadd.f32 %v470, %v488
    %490 = vdwg.mxu0
    %491 = vmatpush.bf16.msra.mxu0 %v396
    %492 = vmatpush.bf16.msra.mxu0 %v395
    %493 = vmatpush.bf16.msra.mxu0 %v394
    %494 = vmatpush.bf16.msra.mxu0 %v393
    %495 = vmatpush.bf16.msra.mxu0 %v392
    %496 = vmatpush.bf16.msra.mxu0 %v391
    %497 = vmatpush.bf16.msra.mxu0 %v390
    %498 = vmatpush.bf16.msra.mxu0 %v389
    %499 = vmatmul.bf16.gmra.mxu0 %v201
    %v500 = vpop.f32.mrf.mxu0
    %v501 = vadd.f32 %v482, %v500
    %v502 = vpop.f32.mrf.mxu0
    %v503 = vadd.f32 %v484, %v502
    %504 = vmatmul.bf16.gmra.mxu0 %v206
    %v505 = vpop.f32.mrf.mxu0
    %v506 = vadd.f32 %v487, %v505
    %v507 = vpop.f32.mrf.mxu0
    %v508 = vadd.f32 %v489, %v507
    %509 = vdwg.mxu0
    %510 = vmatpush.bf16.msra.mxu0 %v404
    %511 = vmatpush.bf16.msra.mxu0 %v403
    %512 = vmatpush.bf16.msra.mxu0 %v402
    %513 = vmatpush.bf16.msra.mxu0 %v401
    %514 = vmatpush.bf16.msra.mxu0 %v400
    %515 = vmatpush.bf16.msra.mxu0 %v399
    %516 = vmatpush.bf16.msra.mxu0 %v398
    %517 = vmatpush.bf16.msra.mxu0 %v397
    %518 = vmatmul.bf16.gmra.mxu0 %v202
    %v519 = vpop.f32.mrf.mxu0
    %v520 = vadd.f32 %v501, %v519
    %v521 = vpop.f32.mrf.mxu0
    %v522 = vadd.f32 %v503, %v521
    %523 = vmatmul.bf16.gmra.mxu0 %v207
    %v524 = vpop.f32.mrf.mxu0
    %v525 = vadd.f32 %v506, %v524
    %v526 = vpop.f32.mrf.mxu0
    %v527 = vadd.f32 %v508, %v526
    %528 = vdwg.mxu0
    %529 = vmatpush.bf16.msra.mxu0 %v412
    %530 = vmatpush.bf16.msra.mxu0 %v411
    %531 = vmatpush.bf16.msra.mxu0 %v410
    %532 = vmatpush.bf16.msra.mxu0 %v409
    %533 = vmatpush.bf16.msra.mxu0 %v408
    %534 = vmatpush.bf16.msra.mxu0 %v407
    %535 = vmatpush.bf16.msra.mxu0 %v406
    %536 = vmatpush.bf16.msra.mxu0 %v405
    %537 = vmatmul.bf16.gmra.mxu0 %v203
    %v538 = vpop.f32.mrf.mxu0
    %v539 = vadd.f32 %v520, %v538
    %v540 = vpop.f32.mrf.mxu0
    %v541 = vadd.f32 %v522, %v540
    %542 = vmatmul.bf16.gmra.mxu0 %v208
    %v543 = vpop.f32.mrf.mxu0
    %v544 = vadd.f32 %v525, %v543
    %v545 = vpop.f32.mrf.mxu0
    %v546 = vadd.f32 %v527, %v545
    %547 = vdwg.mxu0
    %v548 = vadd.f32 %v209, %v539
    %v549 = vadd.f32 %v210, %v541
    %v550 = vadd.f32 %v211, %v544
    %v551 = vadd.f32 %v212, %v546
    %552 = vst [vmem:[#allocation8] sm:$0xff] %v548
    %553 = vst [vmem:[#allocation8 + $0x8] sm:$0xff] %v549
    %554 = vst [vmem:[#allocation8 + $0x10] sm:$0xff] %v550
    %555 = vst [vmem:[#allocation8 + $0x18] sm:$0xff] %v551
    // Predicated region
    $region38: #{tpu_custom_call.1} parent=1 // pred_check
      %p556 = pneg %p66
    $region39: #{tpu_custom_call.1} parent=1 // pred_check_branch
      %558 = sbr.rel (%p556) target = $region41
    $region40: #{tpu_custom_call.1} parent=1 // pred_region
      %v559 = vld [vmem:[#allocation8] sm:$0xff]
      %v560 = vld [vmem:[#allocation8 + $0x8] sm:$0xff]
      %v561 = vld [vmem:[#allocation8 + $0x10] sm:$0xff]
      %v562 = vld [vmem:[#allocation8 + $0x18] sm:$0xff]
      %v563 = vld [vmem:[%s2] sm:$0xff]
      %v564 = vld [vmem:[%s2 + $0x8] sm:$0xff]
      %v565 = vld [vmem:[%s2 + $0x10] sm:$0xff]
      %v566 = vld [vmem:[%s2 + $0x18] sm:$0xff]
      %568 = vset.pattern.permute.xlu0 0
      %569 = vperm.xlu0 %568, %v563
      %v570 = vpop.permute.xlu0 %569
      %573 = vset.pattern.permute.xlu0 0
      %574 = vperm.xlu0 %573, %v564
      %v575 = vpop.permute.xlu0 %574
      %578 = vset.pattern.permute.xlu0 0
      %579 = vperm.xlu0 %578, %v565
      %v580 = vpop.permute.xlu0 %579
      %583 = vset.pattern.permute.xlu0 0
      %584 = vperm.xlu0 %583, %v566
      %v585 = vpop.permute.xlu0 %584
      %v587 = vmul.f32 %v559, %v570
      %v588 = vmul.f32 %v560, %v575
      %v589 = vmul.f32 %v561, %v580
      %v590 = vmul.f32 %v562, %v585
      %v591 = vld [vmem:[%s3] sm:$0xff]
      %v592 = vld [vmem:[%s3 + $0x8] sm:$0xff]
      %v593 = vld [vmem:[%s3 + $0x10] sm:$0xff]
      %v594 = vld [vmem:[%s3 + $0x18] sm:$0xff]
      %v595 = vpack.c.bf16 %v588, %v587
      %v596 = vpack.c.bf16 %v590, %v589
      %v597 = vld [vmem:[#allocation7] sm:$0xf]
      %v598 = vld [vmem:[#allocation7 + $0x4] sm:$0xf]
      %v599 = vld [vmem:[#allocation7 + $0x8] sm:$0xf]
      %v600 = vld [vmem:[#allocation7 + $0xc] sm:$0xf]
      %v601 = vld [vmem:[#allocation7 + $0x10] sm:$0xf]
      %v602 = vld [vmem:[#allocation7 + $0x14] sm:$0xf]
      %v603 = vld [vmem:[#allocation7 + $0x18] sm:$0xf]
      %v604 = vld [vmem:[#allocation7 + $0x1c] sm:$0xf]
      %v605 = vld [vmem:[#allocation7 + $0x20] sm:$0xf]
      %v606 = vld [vmem:[#allocation7 + $0x24] sm:$0xf]
      %v607 = vld [vmem:[#allocation7 + $0x28] sm:$0xf]
      %v608 = vld [vmem:[#allocation7 + $0x2c] sm:$0xf]
      %v609 = vld [vmem:[#allocation7 + $0x30] sm:$0xf]
      %v610 = vld [vmem:[#allocation7 + $0x34] sm:$0xf]
      %v611 = vld [vmem:[#allocation7 + $0x38] sm:$0xf]
      %v612 = vld [vmem:[#allocation7 + $0x3c] sm:$0xf]
      %v629 = vunpack.c.l.b16 %v597
      %v630 = vunpack.c.l.b16 %v598
      %v631 = vunpack.c.l.b16 %v599
      %v632 = vunpack.c.l.b16 %v600
      %v633 = vunpack.c.l.b16 %v601
      %v634 = vunpack.c.l.b16 %v602
      %v635 = vunpack.c.l.b16 %v603
      %v636 = vunpack.c.l.b16 %v604
      %v637 = vunpack.c.l.b16 %v605
      %v638 = vunpack.c.l.b16 %v606
      %v639 = vunpack.c.l.b16 %v607
      %v640 = vunpack.c.l.b16 %v608
      %v641 = vunpack.c.l.b16 %v609
      %v642 = vunpack.c.l.b16 %v610
      %v643 = vunpack.c.l.b16 %v611
      %v644 = vunpack.c.l.b16 %v612
      %v645 = vpack.c.b16 %v630, %v629
      %v646 = vpack.c.b16 %v632, %v631
      %v647 = vpack.c.b16 %v634, %v633
      %v648 = vpack.c.b16 %v636, %v635
      %v649 = vpack.c.b16 %v638, %v637
      %v650 = vpack.c.b16 %v640, %v639
      %v651 = vpack.c.b16 %v642, %v641
      %v652 = vpack.c.b16 %v644, %v643
      %661 = vmatpush.bf16.msra.mxu0 %v652
      %662 = vmatpush.bf16.msra.mxu0 %v651
      %663 = vmatpush.bf16.msra.mxu0 %v650
      %664 = vmatpush.bf16.msra.mxu0 %v649
      %665 = vmatpush.bf16.msra.mxu0 %v648
      %666 = vmatpush.bf16.msra.mxu0 %v647
      %667 = vmatpush.bf16.msra.mxu0 %v646
      %668 = vmatpush.bf16.msra.mxu0 %v645
      %669 = vmatmul.bf16.gmra.mxu0 %v595
      %v670 = vpop.f32.mrf.mxu0
      %v671 = vadd.f32 0.0, %v670
      %v672 = vpop.f32.mrf.mxu0
      %v673 = vadd.f32 0.0, %v672
      %674 = vmatmul.bf16.gmra.mxu0 %v596
      %v675 = vpop.f32.mrf.mxu0
      %v676 = vadd.f32 0.0, %v675
      %v677 = vpop.f32.mrf.mxu0
      %v678 = vadd.f32 0.0, %v677
      %679 = vdwg.mxu0
      %v680 = vadd.f32 %v591, %v671
      %v681 = vadd.f32 %v592, %v673
      %v682 = vadd.f32 %v593, %v676
      %v683 = vadd.f32 %v594, %v678
      %v684 = vmax.f32 %v680, 0.0
      %v685 = vmax.f32 %v681, 0.0
      %v686 = vmax.f32 %v682, 0.0
      %v687 = vmax.f32 %v683, 0.0
      %688 = vst [vmem:[#allocation8] sm:$0xff] %v684
      %689 = vst [vmem:[#allocation8 + $0x8] sm:$0xff] %v685
      %690 = vst [vmem:[#allocation8 + $0x10] sm:$0xff] %v686
      %691 = vst [vmem:[#allocation8 + $0x18] sm:$0xff] %v687
    $region41: #{tpu_custom_call.1} parent=1 // pred_fallthru
      _
    // Predicated region
    $region42: #{tpu_custom_call.1} parent=1 // pred_check
      _
    $region43: #{tpu_custom_call.1} parent=1 // pred_check_branch
      %693 = sbr.rel (0) target = $region45
    $region44: #{tpu_custom_call.1} parent=1 // pred_region
      %695 = vsyncadd [#allocation4], 0
      %s696 = sshll.u32 [#allocation8], 4
      %s697 = int_to_ptr.vmem [resolvable:$true] %s696
      %s698 = sshll.u32 %s5, 4
      %s699 = int_to_ptr.hbm [resolvable:$true] %s698
      %704 = dma.vmem_to_hbm [thread:$0]  %s697, 512, %s699, [#allocation4], 128, 128, 8
    $region45: #{tpu_custom_call.1} parent=1 // pred_fallthru
      _
    // Predicated region
    $region46: #{tpu_custom_call.1} parent=1 // pred_check
      _
    $region47: #{tpu_custom_call.1} parent=1 // pred_check_branch
      %706 = sbr.rel (0) target = $region49
    $region48: #{tpu_custom_call.1} parent=1 // pred_region
      %708 = dma.done [#allocation4], 512
    $region49: #{tpu_custom_call.1} parent=1 // pred_fallthru
      _
    %709 = vsyncpa [#allocation3], 1
    %710 = vsyncpa [#allocation6], 1
    %711 = vsyncpa [#allocation4], 1

</llo_original>
